<compile_context>
chip_gen: v5e
topology: v5e:2x2
jax: 0.10.0
libtpu: 0.0.40
codegen_flags: <defaults>
</compile_context>

<pallas_src>
import functools
import math

import jax
import jax.numpy as jnp
import numpy as np
from jax.experimental import pallas as pl
from jax.experimental.pallas import tpu as pltpu


# ----------------------------------------------------------------------------
# Gabor filter bank (glue).
# TODO(synk): GaborFilterBank class was not provided; a canonical deterministic
# Gabor bank (theta x sf x phase) with stride + reflect padding is used here.
# ----------------------------------------------------------------------------
def make_gabor_bank(in_channels, fsize, thetas, sfs, phases):
    half = (fsize - 1) / 2.0
    ys, xs = jnp.meshgrid(
        jnp.arange(fsize, dtype=jnp.float32) - half,
        jnp.arange(fsize, dtype=jnp.float32) - half,
        indexing="ij",
    )
    sigma = fsize / 4.0
    env = jnp.exp(-(xs ** 2 + ys ** 2) / (2.0 * sigma ** 2))
    filters = []
    for theta in thetas:
        for sf in sfs:
            for ph in phases:
                xr = xs * jnp.cos(theta) + ys * jnp.sin(theta)
                filters.append(env * jnp.cos(2.0 * jnp.pi * sf * xr + ph))
    bank = jnp.stack(filters)[:, None, :, :]                  # (O, 1, f, f)
    bank = jnp.tile(bank, (1, in_channels, 1, 1)) / in_channels
    return bank.astype(jnp.float32)                           # (O, I, f, f)


def gfb_forward(x_nchw, bank, stride, contrast=1.0):
    """Gabor front end.  Emits NHWC directly (no standalone transpose pass)."""
    pad = (bank.shape[-1] - 1) // 2
    xp = jnp.pad(x_nchw, ((0, 0), (0, 0), (pad, pad), (pad, pad)), mode="reflect")
    out = jax.lax.conv_general_dilated(
        xp, bank, (stride, stride), "VALID",
        dimension_numbers=("NCHW", "OIHW", "NHWC"),
        precision=jax.lax.Precision.HIGHEST,
    )
    return out * contrast                                     # (N, H, W, C)


# ----------------------------------------------------------------------------
# Pallas kernel: divisive normalization hot path (square_act=True branch).
# ----------------------------------------------------------------------------
def divnorm_kernel(x_ref, w_ref, sig2_ref, o_ref, sq_ref):
    # x_ref   : (NB, H, W*C)    simple cells (pre-square), f32, W*C fused in lanes
    # w_ref   : (K, W*C, W*C)   bf16 block-Toeplitz div weights (column window,
    #                           column reflect pad and BN constant pre-folded)
    # sig2_ref: (1, W*C)        (sigma**2 + 1e-5) * bn_fold, tiled over x
    # o_ref   : (NB*H, W*C)     normalized output, lane-dense
    # sq_ref  : (NB, H+K-1, W*C) f32 scratch: row-reflect-padded squared cells
    NB, H, WC = x_ref.shape
    K = w_ref.shape[0]
    pad = (K - 1) // 2

    # Square ONCE at full (128) lane width.
    x = x_ref[...]
    sq = x * x                                                # (NB, H, WC), f32

    # Row reflect halo built in-kernel: interior + 2*pad full-width row copies.
    sq_ref[:, pad:pad + H, :] = sq
    for p in range(pad):
        sq_ref[:, pad - 1 - p:pad - p, :] = sq[:, p + 1:p + 2, :]
        sq_ref[:, pad + H + p:pad + H + p + 1, :] = sq[:, H - 2 - p:H - 1 - p, :]

    # Divisive conv: K matmuls with 128-wide MXU output columns, f32 accumulate.
    # Operands are cast to bf16 (MXU-native on v6e/v7x); elementwise stays f32.
    acc = jnp.zeros((NB * H, WC), jnp.float32)
    for ky in range(K):
        a = sq_ref[:, ky:ky + H, :].reshape(NB * H, WC).astype(jnp.bfloat16)
        acc = acc + jnp.dot(a, w_ref[ky], preferred_element_type=jnp.float32)

    norm = acc + sig2_ref[...]                                # sigma^2+eps (+BN) folded
    center = sq.reshape(NB * H, WC)                           # already in output layout
    out = center * pl.reciprocal(norm, approx=True)           # divide -> EUP reciprocal
    o_ref[...] = jnp.maximum(out, 0.0)                        # output_relu


# ----------------------------------------------------------------------------
# Wrapper-side parameter preprocessing (hoisted out of the grid loop).
# ----------------------------------------------------------------------------
def _build_folded_div_weights(div_w, W):
    """(O, I, K, K) conv weights -> (K, W*C, W*C) block-Toeplitz matrices.

    M_ky[cu*C + i, x*C + o] = sum_{kx : reflect(x + kx - pad) == cu} w[o, i, ky, kx]
    so a full (W*C)-wide squared image row contracted with M_ky yields that
    row's contribution to the divisive conv with the column reflect padding
    folded in (no padded columns ever materialized).
    """
    O, I, K, _ = div_w.shape
    pad = (K - 1) // 2
    fold = np.zeros((K, W, W), np.float32)                    # [kx, x, cu]
    for kx in range(K):
        for x in range(W):
            j = x + kx - pad
            cu = -j if j < 0 else (2 * (W - 1) - j if j >= W else j)
            fold[kx, x, cu] = 1.0
    w_t = jnp.transpose(div_w, (2, 3, 1, 0))                  # (ky, kx, I, O)
    wf = jnp.einsum("axc,kaio->kcixo", jnp.asarray(fold), w_t,
                    precision=jax.lax.Precision.HIGHEST)      # (K, cu, I, x, O)
    return wf.reshape(K, W * I, W * O)


def _pick_batch_block(N, H, target_rows=1024):
    """~target_rows output rows per grid step, but keep >=2 parallel steps when
    N >= 2 (v7x megacore); ragged batches are zero-padded by the caller rather
    than letting the block size collapse to 1."""
    nb = max(1, min(N, target_rows // max(1, H)))
    if N >= 2:
        nb = min(nb, (N + 1) // 2)
    return nb


# Eval-mode BatchNorm (running stats 0/1, gamma=1, beta=0) folds to a constant
# scale; folding it into the *denominator* lets the kernel skip the multiply.
_BN_FOLD = math.sqrt(1.0 + 1e-5)


# ----------------------------------------------------------------------------
# Wrapper (NCHW in / NCHW out, returns {'out': ...} like the PyTorch module).
# ----------------------------------------------------------------------------
@functools.partial(jax.jit, static_argnames=("stride",))
def divnorm_forward(x_nchw, gabor_bank, div_w, sigma, stride=4):
    # TODO(synk): output_bn / output_relu are not defined in the provided
    # __init__; assumed BatchNorm2d(hidden_dim) in eval mode (stats 0/1,
    # identity affine) + ReLU, folded into the kernel.
    simple = gfb_forward(x_nchw, gabor_bank, stride)          # (N, H, W, C) NHWC
    N, H, W, C = simple.shape
    K = div_w.shape[-1]
    pad = (K - 1) // 2
    WC = W * C
    assert H > pad and W > pad, "reflect padding needs spatial extent > pad"
    # NOTE: W*C == 128 here -> fully lane-dense stores; other shapes remain
    # correct but fall back to masked partial stores.

    w_fold = (_build_folded_div_weights(div_w, W) * _BN_FOLD).astype(jnp.bfloat16)
    sig2 = jnp.tile((sigma.reshape(1, C) ** 2 + 1e-5) * _BN_FOLD, (1, W))  # (1, W*C)

    x_fused = simple.reshape(N, H, WC)                        # free (NHWC -> lane-fused)
    NB = _pick_batch_block(N, H)
    num_blocks = -(-N // NB)
    Npad = num_blocks * NB
    if Npad != N:                                             # ragged batch -> zero pad
        x_fused = jnp.pad(x_fused, ((0, Npad - N), (0, 0), (0, 0)))

    out_flat = pl.pallas_call(
        divnorm_kernel,
        out_shape=jax.ShapeDtypeStruct((Npad * H, WC), jnp.float32),
        grid=(num_blocks,),
        in_specs=[
            pl.BlockSpec((NB, H, WC), lambda b: (b, 0, 0)),
            pl.BlockSpec((K, WC, WC), lambda b: (0, 0, 0)),
            pl.BlockSpec((1, WC), lambda b: (0, 0)),
        ],
        out_specs=pl.BlockSpec((NB * H, WC), lambda b: (b, 0)),
        scratch_shapes=[pltpu.VMEM((NB, H + K - 1, WC), jnp.float32)],
        compiler_params=pltpu.CompilerParams(
            dimension_semantics=("parallel",),
        ),
    )(x_fused, w_fold, sig2)

    out_nhwc = out_flat[: N * H].reshape(N, H, W, C)
    return {"out": jnp.transpose(out_nhwc, (0, 3, 1, 2))}     # back to NCHW (API fidelity)


# ----------------------------------------------------------------------------
# Pure-JAX reference (HIGHEST precision) for correctness checking.
# ----------------------------------------------------------------------------
def divnorm_reference(x_nchw, gabor_bank, div_w, sigma, stride=4):
    simple = jnp.transpose(gfb_forward(x_nchw, gabor_bank, stride), (0, 3, 1, 2))
    s2 = simple ** 2
    pad = (div_w.shape[-1] - 1) // 2
    s2p = jnp.pad(s2, ((0, 0), (0, 0), (pad, pad), (pad, pad)), mode="reflect")
    norm = jax.lax.conv_general_dilated(
        s2p, div_w, (1, 1), "VALID",
        dimension_numbers=("NCHW", "OIHW", "NCHW"),
        precision=jax.lax.Precision.HIGHEST,
    )
    norm = norm + sigma ** 2 + 1e-5
    out = (s2 / norm) * (1.0 / math.sqrt(1.0 + 1e-5))
    return jnp.maximum(out, 0.0)


if __name__ == "__main__":
    key = jax.random.PRNGKey(0)
    k_x, k_w = jax.random.split(key)

    # Module hyperparameters (small, consistent with __init__).
    in_channels = 1
    l_filter_size = 7
    l_theta = [0.0, jnp.pi / 4, jnp.pi / 2, 3 * jnp.pi / 4]   # 4 orientations
    l_sfs = [0.1, 0.2]                                        # 2 spatial freqs
    l_phase = [0.0, jnp.pi / 2]                               # 2 phases
    divnorm_fsize = 5
    stride = 4
    hidden_dim = len(l_theta) * len(l_sfs) * len(l_phase)     # gfb.out_dim = 16

    # Deterministic parameter init (mirrors nonnegative_weights_init + sigma=1).
    gabor_bank = make_gabor_bank(in_channels, l_filter_size, l_theta, l_sfs, l_phase)
    div_w = jax.random.uniform(
        k_w, (hidden_dim, hidden_dim, divnorm_fsize, divnorm_fsize),
        minval=0.0, maxval=1.0, dtype=jnp.float32,
    )
    sigma = jnp.ones((1, hidden_dim, 1, 1), jnp.float32)

    # Input image batch (NCHW, PyTorch convention).
    x = jax.random.normal(k_x, (2, in_channels, 32, 32), dtype=jnp.float32)

    out = divnorm_forward(x, gabor_bank, div_w, sigma, stride=stride)
    out_arr = jax.block_until_ready(out["out"])

    ref = divnorm_reference(x, gabor_bank, div_w, sigma, stride=stride)
    assert out_arr.shape == ref.shape == (2, hidden_dim, 8, 8)
    # Tolerance sized for the intentional bf16 MXU operands (~0.4% worst case on
    # the non-negative 400-term contraction) plus the EUP approximate reciprocal,
    # compared against the HIGHEST-precision XLA reference.
    assert jnp.allclose(out_arr, ref, rtol=2e-2, atol=1e-5), "mismatch vs reference"

    print("KERNEL_OK")
</pallas_src>

<mosaic_0001>
module attributes {stable_mosaic.version = 11 : i64} {
  func.func @divnorm_kernel(%arg0: i32, %arg1: memref<1x8x128xf32, #tpu.memory_space<vmem>>, %arg2: memref<5x128x128xbf16, #tpu.memory_space<vmem>>, %arg3: memref<1x128xf32, #tpu.memory_space<vmem>>, %arg4: memref<8x128xf32, #tpu.memory_space<vmem>>, %arg5: memref<1x12x128xf32, #tpu.memory_space<vmem>>) attributes {dimension_semantics = [#tpu.dimension_semantics<parallel>], iteration_bounds = array<i64: 2>, scalar_prefetch = 0 : i64, scratch_operands = 1 : i64, tpu.core_type = #tpu.core_type<tc>, window_params = [{transform_indices = @transform_0, window_bounds = array<i64: 1, 8, 128>}, {pipeline_mode = #tpu.pipeline_mode<synchronous>, transform_indices = @transform_1, window_bounds = array<i64: 5, 128, 128>}, {pipeline_mode = #tpu.pipeline_mode<synchronous>, transform_indices = @transform_2, window_bounds = array<i64: 1, 128>}, {transform_indices = @transform_3, window_bounds = array<i64: 8, 128>}]} {
    %c0 = arith.constant 0 : index
    %c0_0 = arith.constant 0 : index
    %c0_1 = arith.constant 0 : index
    %0 = vector.load %arg1[%c0, %c0_0, %c0_1] : memref<1x8x128xf32, #tpu.memory_space<vmem>>, vector<1x8x128xf32>
    %1 = arith.mulf %0, %0 : vector<1x8x128xf32>
    %c0_2 = arith.constant 0 : index
    %c2 = arith.constant 2 : index
    %c0_3 = arith.constant 0 : index
    %2 = vector.load %arg5[%c0_2, %c2, %c0_3] : memref<1x12x128xf32, #tpu.memory_space<vmem>>, vector<1x8x128xf32>
    tpu.vector_store %arg5[%c0_2, %c2, %c0_3], %1 {strides = array<i32>} : memref<1x12x128xf32, #tpu.memory_space<vmem>>, vector<1x8x128xf32>,
    %3 = vector.extract_strided_slice %1 {offsets = [0, 1, 0], sizes = [1, 1, 128], strides = [1, 1, 1]} : vector<1x8x128xf32> to vector<1x1x128xf32>
    %c0_4 = arith.constant 0 : index
    %c1 = arith.constant 1 : index
    %c0_5 = arith.constant 0 : index
    %4 = vector.load %arg5[%c0_4, %c1, %c0_5] : memref<1x12x128xf32, #tpu.memory_space<vmem>>, vector<1x1x128xf32>
    tpu.vector_store %arg5[%c0_4, %c1, %c0_5], %3 {strides = array<i32>} : memref<1x12x128xf32, #tpu.memory_space<vmem>>, vector<1x1x128xf32>,
    %5 = vector.extract_strided_slice %1 {offsets = [0, 6, 0], sizes = [1, 1, 128], strides = [1, 1, 1]} : vector<1x8x128xf32> to vector<1x1x128xf32>
    %c0_6 = arith.constant 0 : index
    %c10 = arith.constant 10 : index
    %c0_7 = arith.constant 0 : index
    %6 = vector.load %arg5[%c0_6, %c10, %c0_7] : memref<1x12x128xf32, #tpu.memory_space<vmem>>, vector<1x1x128xf32>
    tpu.vector_store %arg5[%c0_6, %c10, %c0_7], %5 {strides = array<i32>} : memref<1x12x128xf32, #tpu.memory_space<vmem>>, vector<1x1x128xf32>,
    %7 = vector.extract_strided_slice %1 {offsets = [0, 2, 0], sizes = [1, 1, 128], strides = [1, 1, 1]} : vector<1x8x128xf32> to vector<1x1x128xf32>
    %c0_8 = arith.constant 0 : index
    %c0_9 = arith.constant 0 : index
    %c0_10 = arith.constant 0 : index
    %8 = vector.load %arg5[%c0_8, %c0_9, %c0_10] : memref<1x12x128xf32, #tpu.memory_space<vmem>>, vector<1x1x128xf32>
    tpu.vector_store %arg5[%c0_8, %c0_9, %c0_10], %7 {strides = array<i32>} : memref<1x12x128xf32, #tpu.memory_space<vmem>>, vector<1x1x128xf32>,
    %9 = vector.extract_strided_slice %1 {offsets = [0, 5, 0], sizes = [1, 1, 128], strides = [1, 1, 1]} : vector<1x8x128xf32> to vector<1x1x128xf32>
    %c0_11 = arith.constant 0 : index
    %c11 = arith.constant 11 : index
    %c0_12 = arith.constant 0 : index
    %10 = vector.load %arg5[%c0_11, %c11, %c0_12] : memref<1x12x128xf32, #tpu.memory_space<vmem>>, vector<1x1x128xf32>
    tpu.vector_store %arg5[%c0_11, %c11, %c0_12], %9 {strides = array<i32>} : memref<1x12x128xf32, #tpu.memory_space<vmem>>, vector<1x1x128xf32>,
    %cst = arith.constant 0.000000e+00 : f32
    %11 = vector.broadcast %cst : f32 to vector<8x128xf32>
    %c0_13 = arith.constant 0 : index
    %c0_14 = arith.constant 0 : index
    %c0_15 = arith.constant 0 : index
    %12 = vector.load %arg5[%c0_13, %c0_14, %c0_15] : memref<1x12x128xf32, #tpu.memory_space<vmem>>, vector<1x8x128xf32>
    %13 = vector.shape_cast %12 : vector<1x8x128xf32> to vector<8x128xf32>
    %14 = arith.truncf %13 : vector<8x128xf32> to vector<8x128xbf16>
    %c0_16 = arith.constant 0 : index
    %c0_17 = arith.constant 0 : index
    %c0_18 = arith.constant 0 : index
    %15 = vector.load %arg2[%c0_16, %c0_17, %c0_18] : memref<5x128x128xbf16, #tpu.memory_space<vmem>>, vector<1x128x128xbf16>
    %16 = vector.shape_cast %15 : vector<1x128x128xbf16> to vector<128x128xbf16>
    %cst_19 = arith.constant dense<0.000000e+00> : vector<8x128xf32>
    %17 = tpu.matmul %14, %16, %cst_19 {dimension_numbers = #tpu.dot_dimension_numbers<[1], [0], [0], [1], [0, 0, 1, 1], [], []>} : vector<8x128xbf16>, vector<128x128xbf16>, vector<8x128xf32> -> vector<8x128xf32>
    %18 = arith.addf %11, %17 : vector<8x128xf32>
    %c0_20 = arith.constant 0 : index
    %c1_21 = arith.constant 1 : index
    %c0_22 = arith.constant 0 : index
    %19 = vector.load %arg5[%c0_20, %c1_21, %c0_22] : memref<1x12x128xf32, #tpu.memory_space<vmem>>, vector<1x8x128xf32>
    %20 = vector.shape_cast %19 : vector<1x8x128xf32> to vector<8x128xf32>
    %21 = arith.truncf %20 : vector<8x128xf32> to vector<8x128xbf16>
    %c1_23 = arith.constant 1 : index
    %c0_24 = arith.constant 0 : index
    %c0_25 = arith.constant 0 : index
    %22 = vector.load %arg2[%c1_23, %c0_24, %c0_25] : memref<5x128x128xbf16, #tpu.memory_space<vmem>>, vector<1x128x128xbf16>
    %23 = vector.shape_cast %22 : vector<1x128x128xbf16> to vector<128x128xbf16>
    %cst_26 = arith.constant dense<0.000000e+00> : vector<8x128xf32>
    %24 = tpu.matmul %21, %23, %cst_26 {dimension_numbers = #tpu.dot_dimension_numbers<[1], [0], [0], [1], [0, 0, 1, 1], [], []>} : vector<8x128xbf16>, vector<128x128xbf16>, vector<8x128xf32> -> vector<8x128xf32>
    %25 = arith.addf %18, %24 : vector<8x128xf32>
    %c0_27 = arith.constant 0 : index
    %c2_28 = arith.constant 2 : index
    %c0_29 = arith.constant 0 : index
    %26 = vector.load %arg5[%c0_27, %c2_28, %c0_29] : memref<1x12x128xf32, #tpu.memory_space<vmem>>, vector<1x8x128xf32>
    %27 = vector.shape_cast %26 : vector<1x8x128xf32> to vector<8x128xf32>
    %28 = arith.truncf %27 : vector<8x128xf32> to vector<8x128xbf16>
    %c2_30 = arith.constant 2 : index
    %c0_31 = arith.constant 0 : index
    %c0_32 = arith.constant 0 : index
    %29 = vector.load %arg2[%c2_30, %c0_31, %c0_32] : memref<5x128x128xbf16, #tpu.memory_space<vmem>>, vector<1x128x128xbf16>
    %30 = vector.shape_cast %29 : vector<1x128x128xbf16> to vector<128x128xbf16>
    %cst_33 = arith.constant dense<0.000000e+00> : vector<8x128xf32>
    %31 = tpu.matmul %28, %30, %cst_33 {dimension_numbers = #tpu.dot_dimension_numbers<[1], [0], [0], [1], [0, 0, 1, 1], [], []>} : vector<8x128xbf16>, vector<128x128xbf16>, vector<8x128xf32> -> vector<8x128xf32>
    %32 = arith.addf %25, %31 : vector<8x128xf32>
    %c0_34 = arith.constant 0 : index
    %c3 = arith.constant 3 : index
    %c0_35 = arith.constant 0 : index
    %33 = vector.load %arg5[%c0_34, %c3, %c0_35] : memref<1x12x128xf32, #tpu.memory_space<vmem>>, vector<1x8x128xf32>
    %34 = vector.shape_cast %33 : vector<1x8x128xf32> to vector<8x128xf32>
    %35 = arith.truncf %34 : vector<8x128xf32> to vector<8x128xbf16>
    %c3_36 = arith.constant 3 : index
    %c0_37 = arith.constant 0 : index
    %c0_38 = arith.constant 0 : index
    %36 = vector.load %arg2[%c3_36, %c0_37, %c0_38] : memref<5x128x128xbf16, #tpu.memory_space<vmem>>, vector<1x128x128xbf16>
    %37 = vector.shape_cast %36 : vector<1x128x128xbf16> to vector<128x128xbf16>
    %cst_39 = arith.constant dense<0.000000e+00> : vector<8x128xf32>
    %38 = tpu.matmul %35, %37, %cst_39 {dimension_numbers = #tpu.dot_dimension_numbers<[1], [0], [0], [1], [0, 0, 1, 1], [], []>} : vector<8x128xbf16>, vector<128x128xbf16>, vector<8x128xf32> -> vector<8x128xf32>
    %39 = arith.addf %32, %38 : vector<8x128xf32>
    %c0_40 = arith.constant 0 : index
    %c4 = arith.constant 4 : index
    %c0_41 = arith.constant 0 : index
    %40 = vector.load %arg5[%c0_40, %c4, %c0_41] : memref<1x12x128xf32, #tpu.memory_space<vmem>>, vector<1x8x128xf32>
    %41 = vector.shape_cast %40 : vector<1x8x128xf32> to vector<8x128xf32>
    %42 = arith.truncf %41 : vector<8x128xf32> to vector<8x128xbf16>
    %c4_42 = arith.constant 4 : index
    %c0_43 = arith.constant 0 : index
    %c0_44 = arith.constant 0 : index
    %43 = vector.load %arg2[%c4_42, %c0_43, %c0_44] : memref<5x128x128xbf16, #tpu.memory_space<vmem>>, vector<1x128x128xbf16>
    %44 = vector.shape_cast %43 : vector<1x128x128xbf16> to vector<128x128xbf16>
    %cst_45 = arith.constant dense<0.000000e+00> : vector<8x128xf32>
    %45 = tpu.matmul %42, %44, %cst_45 {dimension_numbers = #tpu.dot_dimension_numbers<[1], [0], [0], [1], [0, 0, 1, 1], [], []>} : vector<8x128xbf16>, vector<128x128xbf16>, vector<8x128xf32> -> vector<8x128xf32>
    %46 = arith.addf %39, %45 : vector<8x128xf32>
    %c0_46 = arith.constant 0 : index
    %c0_47 = arith.constant 0 : index
    %47 = vector.load %arg3[%c0_46, %c0_47] : memref<1x128xf32, #tpu.memory_space<vmem>>, vector<1x128xf32>
    %48 = vector.broadcast %47 : vector<1x128xf32> to vector<8x128xf32>
    %49 = arith.addf %46, %48 : vector<8x128xf32>
    %50 = vector.shape_cast %1 : vector<1x8x128xf32> to vector<8x128xf32>
    %51 = tpu.reciprocal %49 {approx = true} : vector<8x128xf32> -> vector<8x128xf32>
    %52 = arith.mulf %50, %51 : vector<8x128xf32>
    %cst_48 = arith.constant 0.000000e+00 : f32
    %53 = vector.broadcast %cst_48 : f32 to vector<8x128xf32>
    %54 = arith.maximumf %52, %53 : vector<8x128xf32>
    %c0_49 = arith.constant 0 : index
    %c0_50 = arith.constant 0 : index
    %55 = vector.load %arg4[%c0_49, %c0_50] : memref<8x128xf32, #tpu.memory_space<vmem>>, vector<8x128xf32>
    tpu.vector_store %arg4[%c0_49, %c0_50], %54 {strides = array<i32>} : memref<8x128xf32, #tpu.memory_space<vmem>>, vector<8x128xf32>,
    return
  }
  func.func @transform_0(%arg0: i32) -> (i32, i32, i32) {
    %c0_i32 = arith.constant 0 : i32
    %c0_i32_0 = arith.constant 0 : i32
    %c0_i32_1 = arith.constant 0 : i32
    return %arg0, %c0_i32, %c0_i32_0 : i32, i32, i32
  }
  func.func @transform_1(%arg0: i32) -> (i32, i32, i32) {
    %c0_i32 = arith.constant 0 : i32
    %c0_i32_0 = arith.constant 0 : i32
    %c0_i32_1 = arith.constant 0 : i32
    %c0_i32_2 = arith.constant 0 : i32
    return %c0_i32, %c0_i32_0, %c0_i32_1 : i32, i32, i32
  }
  func.func @transform_2(%arg0: i32) -> (i32, i32) {
    %c0_i32 = arith.constant 0 : i32
    %c0_i32_0 = arith.constant 0 : i32
    %c0_i32_1 = arith.constant 0 : i32
    return %c0_i32, %c0_i32_0 : i32, i32
  }
  func.func @transform_3(%arg0: i32) -> (i32, i32) {
    %c0_i32 = arith.constant 0 : i32
    %c0_i32_0 = arith.constant 0 : i32
    return %arg0, %c0_i32 : i32, i32
  }
}

</mosaic_0001>

<llo_original>
// kernel: divnorm_forward.1
$region0: #{divnorm_forward.1}
  #allocation0 [shape = 'u32[]', space=smem, size = 0x4, offset = 0x4, fixed_abs, tag = 'smem constant byte address 0x4 - core index']
  #allocation1 [shape = 'u32[72,128]{1,0:T(1,128)}', space=vmem, size = 0x9000, scoped, tag = 'internal scratch']
  #allocation2 [shape = 'f32[1,12,128]{2,1,0:T(8,128)}', space=vmem, size = 0x2000, scoped, tag = 'scratch operand']
  %s0 = inlined_call_operand.vmem [shape: f32[2,8,128], index: 0, kind: input, shape index: {}]
  %s1 = inlined_call_operand.vmem [shape: bf16[5,128,128], index: 1, kind: input, shape index: {}]
  %s2 = inlined_call_operand.vmem [shape: f32[1,128], index: 2, kind: input, shape index: {}]
  %s3 = inlined_call_operand.vmem [shape: f32[16,128], index: 3, kind: output, shape index: {}]
  %s4 = sld [smem:[#allocation0]]
  $region45: #{divnorm_forward.1} parent=0
    _
  %s6 = ssub.s32 1, %s4
  %s7 = scalar_select 0, %s6, %s4
  loop: start=0, step=1, limit=4
  $region2: #{divnorm_forward.1} parent=0 // loop_pre_header
    _
  $region3: #{divnorm_forward.1} parent=0 // loop_header
    %s9 = sphi 0, %s13
    %p10 = scmp.ge.s32.totalorder %s9, 4
    %s19 = sphi 0, %s21
    %s22 = sphi 0, %s19
    %s23 = sphi 0, %s22
    %s39 = sphi 0, %s23
    %s43 = sphi 0, %s43
    %s45 = sphi 0, %s43
    %s46 = sphi 0, %s45
    %s60 = sphi 0, %s46
    %s64 = sphi 0, %s64
    %s66 = sphi 0, %s64
    %s67 = sphi 0, %s66
    %s81 = sphi 0, %s67
    %s87 = sphi 0, %s89
    %s90 = sphi 0, %s87
    %s91 = sphi 0, %s90
    %s107 = sphi 0, %s91
  $region4: #{divnorm_forward.1} parent=0 // loop_header_branch
    %12 = sbr.rel (%p10) target = $region8
  $region5: #{divnorm_forward.1} parent=0 // loop_body
    %s14 = ssub.s32 %s9, 1
    %s15 = ssub.s32 %s9, 2
    %s16 = sadd.s32 %s9, 1
    %s17 = ssub.s32 %s9, %s16
    %p18 = scmp.eq.s32.totalorder %s17, 0
    %s20 = sadd.s32 %s19, 1
    %s21 = scalar_select %p18, %s19, %s20
    %p24 = pneg %p18
    %p25 = scmp.eq.s32.totalorder %s9, 1
    %p26 = por %p24, %p25
    %p27 = scmp.ne.s32.totalorder %s19, %s22
    %p28 = scmp.eq.s32.totalorder %s9, 0
    %p29 = por %p27, %p28
    %p30 = scmp.ne.s32.totalorder %s19, %s22
    %p31 = scmp.eq.s32.totalorder %s14, 1
    %p32 = por %p30, %p31
    %p33 = scmp.ne.s32.totalorder %s22, %s23
    %p34 = scmp.eq.s32.totalorder %s14, 0
    %p35 = por %p33, %p34
    %p36 = scmp.ne.s32.totalorder %s22, %s23
    %p37 = scmp.eq.s32.totalorder %s15, 1
    %p38 = por %p36, %p37
    %p40 = scmp.ne.s32.totalorder %s23, %s39
    %p41 = scmp.eq.s32.totalorder %s15, 0
    %p42 = por %p40, %p41
    %s44 = sadd.s32 %s43, 1
    %p47 = scmp.eq.s32.totalorder %s9, 1
    %p48 = scmp.ne.s32.totalorder %s43, %s45
    %p49 = scmp.eq.s32.totalorder %s9, 0
    %p50 = por %p48, %p49
    %p51 = scmp.ne.s32.totalorder %s43, %s45
    %p52 = scmp.eq.s32.totalorder %s14, 1
    %p53 = por %p51, %p52
    %p54 = scmp.ne.s32.totalorder %s45, %s46
    %p55 = scmp.eq.s32.totalorder %s14, 0
    %p56 = por %p54, %p55
    %p57 = scmp.ne.s32.totalorder %s45, %s46
    %p58 = scmp.eq.s32.totalorder %s15, 1
    %p59 = por %p57, %p58
    %p61 = scmp.ne.s32.totalorder %s46, %s60
    %p62 = scmp.eq.s32.totalorder %s15, 0
    %p63 = por %p61, %p62
    %s65 = sadd.s32 %s64, 1
    %p68 = scmp.eq.s32.totalorder %s9, 1
    %p69 = scmp.ne.s32.totalorder %s64, %s66
    %p70 = scmp.eq.s32.totalorder %s9, 0
    %p71 = por %p69, %p70
    %p72 = scmp.ne.s32.totalorder %s64, %s66
    %p73 = scmp.eq.s32.totalorder %s14, 1
    %p74 = por %p72, %p73
    %p75 = scmp.ne.s32.totalorder %s66, %s67
    %p76 = scmp.eq.s32.totalorder %s14, 0
    %p77 = por %p75, %p76
    %p78 = scmp.ne.s32.totalorder %s66, %s67
    %p79 = scmp.eq.s32.totalorder %s15, 1
    %p80 = por %p78, %p79
    %p82 = scmp.ne.s32.totalorder %s67, %s81
    %p83 = scmp.eq.s32.totalorder %s15, 0
    %p84 = por %p82, %p83
    %s85 = ssub.s32 %s9, %s16
    %p86 = scmp.eq.s32.totalorder %s85, 0
    %s88 = sadd.s32 %s87, 1
    %s89 = scalar_select %p86, %s87, %s88
    %p92 = pneg %p86
    %p93 = scmp.eq.s32.totalorder %s9, 1
    %p94 = por %p92, %p93
    %p95 = scmp.ne.s32.totalorder %s87, %s90
    %p96 = scmp.eq.s32.totalorder %s9, 0
    %p97 = por %p95, %p96
    %p98 = scmp.ne.s32.totalorder %s87, %s90
    %p99 = scmp.eq.s32.totalorder %s14, 1
    %p100 = por %p98, %p99
    %p101 = scmp.ne.s32.totalorder %s90, %s91
    %p102 = scmp.eq.s32.totalorder %s14, 0
    %p103 = por %p101, %p102
    %p104 = scmp.ne.s32.totalorder %s90, %s91
    %p105 = scmp.eq.s32.totalorder %s15, 1
    %p106 = por %p104, %p105
    %p108 = scmp.ne.s32.totalorder %s91, %s107
    %p109 = scmp.eq.s32.totalorder %s15, 0
    %p110 = por %p108, %p109
    %p111 = scmp.le.s32.totalorder 1, %s9
    %p112 = scmp.lt.s32.totalorder %s9, 3
    %p113 = pnand %p111, %p112
    %p114 = pneg %p113
    // Predicated region
    $region9: #{divnorm_forward.1} parent=5 // pred_check
      _
    $region10: #{divnorm_forward.1} parent=5 // pred_check_branch
      %116 = sbr.rel (%p113) target = $region12
    $region11: #{divnorm_forward.1} parent=5 // pred_region
      %s117 = ssub.s32 %s9, 1
      // Predicated region
      $region13: #{divnorm_forward.1} parent=11 // pred_check
        %p118 = pneg %p56
      $region14: #{divnorm_forward.1} parent=11 // pred_check_branch
        %120 = sbr.rel (%p118) target = $region16
      $region15: #{divnorm_forward.1} parent=11 // pred_region
        _
      $region16: #{divnorm_forward.1} parent=11 // pred_fallthru
        _
      // Predicated region
      $region17: #{divnorm_forward.1} parent=11 // pred_check
        %p121 = pneg %p77
      $region18: #{divnorm_forward.1} parent=11 // pred_check_branch
        %123 = sbr.rel (%p121) target = $region20
      $region19: #{divnorm_forward.1} parent=11 // pred_region
        _
      $region20: #{divnorm_forward.1} parent=11 // pred_fallthru
        _
    $region12: #{divnorm_forward.1} parent=5 // pred_fallthru
      _
    %p124 = scmp.lt.s32.totalorder %s9, 2
    // Predicated region
    $region21: #{divnorm_forward.1} parent=5 // pred_check
      %p125 = pneg %p124
    $region22: #{divnorm_forward.1} parent=5 // pred_check_branch
      %127 = sbr.rel (%p125) target = $region24
    $region23: #{divnorm_forward.1} parent=5 // pred_region
      // Predicated region
      $region25: #{divnorm_forward.1} parent=23 // pred_check
        %p128 = pneg %p29
      $region26: #{divnorm_forward.1} parent=23 // pred_check_branch
        %130 = sbr.rel (%p128) target = $region28
      $region27: #{divnorm_forward.1} parent=23 // pred_region
        %p131 = scmp.lt.s32.totalorder %s9, 1
        %s132 = scalar_select %p131, %s9, 1
        %s133 = smul.addr %s132, 8
        %s134 = scalar_lea.vmem %s0, %s133
      $region28: #{divnorm_forward.1} parent=23 // pred_fallthru
        _
    $region24: #{divnorm_forward.1} parent=5 // pred_fallthru
      _
    %p135 = scmp.le.s32.totalorder 1, %s9
    %p136 = scmp.lt.s32.totalorder %s9, 3
    %p137 = pnand %p135, %p136
    %p138 = pneg %p137
    // Predicated region
    $region29: #{divnorm_forward.1} parent=5 // pred_check
      _
    $region30: #{divnorm_forward.1} parent=5 // pred_check_branch
      %140 = sbr.rel (%p137) target = $region32
    $region31: #{divnorm_forward.1} parent=5 // pred_region
      %s141 = ssub.s32 %s9, 1
      %p142 = scmp.lt.s32.totalorder %s14, 1
      %s143 = scalar_select %p142, %s14, 1
      %s144 = smul.addr %s143, 8
      %s145 = scalar_lea.vmem %s0, %s144
      %p146 = pneg %p35
      %p147 = pneg %p32
      %p148 = pneg %p56
      %p149 = pneg %p53
      %p150 = pneg %p77
      %p151 = pneg %p74
      %p152 = pneg %p103
      %p153 = pneg %p100
      %p154 = scmp.lt.s32.totalorder %s14, 1
      %s155 = scalar_select %p154, %s14, 1
      %s156 = smul.addr %s155, 8
      %s157 = scalar_lea.vmem %s3, %s156
      %p158 = scmp.lt.s32.totalorder %s14, 1
      %s159 = scalar_select %p158, %s14, 1
      %s160 = smul.addr %s159, 8
      %s161 = scalar_lea.vmem %s0, %s160
      %p162 = scmp.lt.s32.totalorder %s14, 1
      %s163 = scalar_select %p162, %s14, 1
      %s164 = smul.addr %s163, 8
      %s165 = scalar_lea.vmem %s3, %s164
      %v166 = vld [vmem:[%s161] sm:$0xff]
      %v167 = vmul.f32 %v166, %v166
      %168 = vst [vmem:[#allocation2 + $0x2] sm:$0xff] %v167
      %169 = vst [vmem:[#allocation2] sm:$0x2] %v167
      %170 = vst [vmem:[#allocation2 + $0x4] sm:$0x40] %v167
      %171 = vst [vmem:[#allocation2 - $0x2] sm:$0x4] %v167
      %172 = vst [vmem:[#allocation2 + $0x6] sm:$0x20] %v167
      %v173 = vld [vmem:[#allocation2] sm:$0xff]
      %v174 = vpack.c.bf16 %v173, %v173
      %v175 = vld [vmem:[%s1] sm:$0xf]
      %v176 = vld [vmem:[%s1 + $0x4] sm:$0xf]
      %v177 = vld [vmem:[%s1 + $0x8] sm:$0xf]
      %v178 = vld [vmem:[%s1 + $0xc] sm:$0xf]
      %v179 = vld [vmem:[%s1 + $0x10] sm:$0xf]
      %v180 = vld [vmem:[%s1 + $0x14] sm:$0xf]
      %v181 = vld [vmem:[%s1 + $0x18] sm:$0xf]
      %v182 = vld [vmem:[%s1 + $0x1c] sm:$0xf]
      %v183 = vld [vmem:[%s1 + $0x20] sm:$0xf]
      %v184 = vld [vmem:[%s1 + $0x24] sm:$0xf]
      %v185 = vld [vmem:[%s1 + $0x28] sm:$0xf]
      %v186 = vld [vmem:[%s1 + $0x2c] sm:$0xf]
      %v187 = vld [vmem:[%s1 + $0x30] sm:$0xf]
      %v188 = vld [vmem:[%s1 + $0x34] sm:$0xf]
      %v189 = vld [vmem:[%s1 + $0x38] sm:$0xf]
      %v190 = vld [vmem:[%s1 + $0x3c] sm:$0xf]
      %v191 = vld [vmem:[#allocation2 + $0x1] sm:$0xff]
      %v192 = vpack.c.bf16 %v191, %v191
      %s193 = scalar_lea.vmem %s1, 64
      %v194 = vld [vmem:[%s193] sm:$0xf]
      %v195 = vld [vmem:[%s193 + $0x4] sm:$0xf]
      %v196 = vld [vmem:[%s193 + $0x8] sm:$0xf]
      %v197 = vld [vmem:[%s193 + $0xc] sm:$0xf]
      %v198 = vld [vmem:[%s193 + $0x10] sm:$0xf]
      %v199 = vld [vmem:[%s193 + $0x14] sm:$0xf]
      %v200 = vld [vmem:[%s193 + $0x18] sm:$0xf]
      %v201 = vld [vmem:[%s193 + $0x1c] sm:$0xf]
      %v202 = vld [vmem:[%s193 + $0x20] sm:$0xf]
      %v203 = vld [vmem:[%s193 + $0x24] sm:$0xf]
      %v204 = vld [vmem:[%s193 + $0x28] sm:$0xf]
      %v205 = vld [vmem:[%s193 + $0x2c] sm:$0xf]
      %v206 = vld [vmem:[%s193 + $0x30] sm:$0xf]
      %v207 = vld [vmem:[%s193 + $0x34] sm:$0xf]
      %v208 = vld [vmem:[%s193 + $0x38] sm:$0xf]
      %v209 = vld [vmem:[%s193 + $0x3c] sm:$0xf]
      %v226 = vunpack.c.l.b16 %v194
      %v227 = vunpack.c.l.b16 %v195
      %v228 = vunpack.c.l.b16 %v196
      %v229 = vunpack.c.l.b16 %v197
      %v230 = vunpack.c.l.b16 %v198
      %v231 = vunpack.c.l.b16 %v199
      %v232 = vunpack.c.l.b16 %v200
      %v233 = vunpack.c.l.b16 %v201
      %v234 = vunpack.c.l.b16 %v202
      %v235 = vunpack.c.l.b16 %v203
      %v236 = vunpack.c.l.b16 %v204
      %v237 = vunpack.c.l.b16 %v205
      %v238 = vunpack.c.l.b16 %v206
      %v239 = vunpack.c.l.b16 %v207
      %v240 = vunpack.c.l.b16 %v208
      %v241 = vunpack.c.l.b16 %v209
      %v242 = vpack.c.b16 %v227, %v226
      %v243 = vpack.c.b16 %v229, %v228
      %v244 = vpack.c.b16 %v231, %v230
      %v245 = vpack.c.b16 %v233, %v232
      %v246 = vpack.c.b16 %v235, %v234
      %v247 = vpack.c.b16 %v237, %v236
      %v248 = vpack.c.b16 %v239, %v238
      %v249 = vpack.c.b16 %v241, %v240
      %258 = vmatpush.bf16.msra.mxu0 %v249
      %259 = vmatpush.bf16.msra.mxu0 %v248
      %260 = vmatpush.bf16.msra.mxu0 %v247
      %261 = vmatpush.bf16.msra.mxu0 %v246
      %262 = vmatpush.bf16.msra.mxu0 %v245
      %263 = vmatpush.bf16.msra.mxu0 %v244
      %264 = vmatpush.bf16.msra.mxu0 %v243
      %265 = vmatpush.bf16.msra.mxu0 %v242
      %266 = vmatmul.bf16.gmra.mxu0 %v192
      %v267 = vpop.f32.mrf.mxu0
      %v268 = vadd.f32 0.0, %v267
      %v269 = vpop.f32.mrf.mxu0
      %270 = vdwg.mxu0
      %v287 = vunpack.c.l.b16 %v175
      %v288 = vunpack.c.l.b16 %v176
      %v289 = vunpack.c.l.b16 %v177
      %v290 = vunpack.c.l.b16 %v178
      %v291 = vunpack.c.l.b16 %v179
      %v292 = vunpack.c.l.b16 %v180
      %v293 = vunpack.c.l.b16 %v181
      %v294 = vunpack.c.l.b16 %v182
      %v295 = vunpack.c.l.b16 %v183
      %v296 = vunpack.c.l.b16 %v184
      %v297 = vunpack.c.l.b16 %v185
      %v298 = vunpack.c.l.b16 %v186
      %v299 = vunpack.c.l.b16 %v187
      %v300 = vunpack.c.l.b16 %v188
      %v301 = vunpack.c.l.b16 %v189
      %v302 = vunpack.c.l.b16 %v190
      %v303 = vpack.c.b16 %v288, %v287
      %v304 = vpack.c.b16 %v290, %v289
      %v305 = vpack.c.b16 %v292, %v291
      %v306 = vpack.c.b16 %v294, %v293
      %v307 = vpack.c.b16 %v296, %v295
      %v308 = vpack.c.b16 %v298, %v297
      %v309 = vpack.c.b16 %v300, %v299
      %v310 = vpack.c.b16 %v302, %v301
      %319 = vmatpush.bf16.msra.mxu0 %v310
      %320 = vmatpush.bf16.msra.mxu0 %v309
      %321 = vmatpush.bf16.msra.mxu0 %v308
      %322 = vmatpush.bf16.msra.mxu0 %v307
      %323 = vmatpush.bf16.msra.mxu0 %v306
      %324 = vmatpush.bf16.msra.mxu0 %v305
      %325 = vmatpush.bf16.msra.mxu0 %v304
      %326 = vmatpush.bf16.msra.mxu0 %v303
      %327 = vmatmul.bf16.gmra.mxu0 %v174
      %v328 = vpop.f32.mrf.mxu0
      %v329 = vadd.f32 %v268, %v328
      %v330 = vpop.f32.mrf.mxu0
      %331 = vdwg.mxu0
      %v332 = vld [vmem:[#allocation2 + $0x2] sm:$0xff]
      %v333 = vpack.c.bf16 %v332, %v332
      %s334 = scalar_lea.vmem %s1, 128
      %v335 = vld [vmem:[%s334] sm:$0xf]
      %v336 = vld [vmem:[%s334 + $0x4] sm:$0xf]
      %v337 = vld [vmem:[%s334 + $0x8] sm:$0xf]
      %v338 = vld [vmem:[%s334 + $0xc] sm:$0xf]
      %v339 = vld [vmem:[%s334 + $0x10] sm:$0xf]
      %v340 = vld [vmem:[%s334 + $0x14] sm:$0xf]
      %v341 = vld [vmem:[%s334 + $0x18] sm:$0xf]
      %v342 = vld [vmem:[%s334 + $0x1c] sm:$0xf]
      %v343 = vld [vmem:[%s334 + $0x20] sm:$0xf]
      %v344 = vld [vmem:[%s334 + $0x24] sm:$0xf]
      %v345 = vld [vmem:[%s334 + $0x28] sm:$0xf]
      %v346 = vld [vmem:[%s334 + $0x2c] sm:$0xf]
      %v347 = vld [vmem:[%s334 + $0x30] sm:$0xf]
      %v348 = vld [vmem:[%s334 + $0x34] sm:$0xf]
      %v349 = vld [vmem:[%s334 + $0x38] sm:$0xf]
      %v350 = vld [vmem:[%s334 + $0x3c] sm:$0xf]
      %v367 = vunpack.c.l.b16 %v335
      %v368 = vunpack.c.l.b16 %v336
      %v369 = vunpack.c.l.b16 %v337
      %v370 = vunpack.c.l.b16 %v338
      %v371 = vunpack.c.l.b16 %v339
      %v372 = vunpack.c.l.b16 %v340
      %v373 = vunpack.c.l.b16 %v341
      %v374 = vunpack.c.l.b16 %v342
      %v375 = vunpack.c.l.b16 %v343
      %v376 = vunpack.c.l.b16 %v344
      %v377 = vunpack.c.l.b16 %v345
      %v378 = vunpack.c.l.b16 %v346
      %v379 = vunpack.c.l.b16 %v347
      %v380 = vunpack.c.l.b16 %v348
      %v381 = vunpack.c.l.b16 %v349
      %v382 = vunpack.c.l.b16 %v350
      %v383 = vpack.c.b16 %v368, %v367
      %v384 = vpack.c.b16 %v370, %v369
      %v385 = vpack.c.b16 %v372, %v371
      %v386 = vpack.c.b16 %v374, %v373
      %v387 = vpack.c.b16 %v376, %v375
      %v388 = vpack.c.b16 %v378, %v377
      %v389 = vpack.c.b16 %v380, %v379
      %v390 = vpack.c.b16 %v382, %v381
      %399 = vmatpush.bf16.msra.mxu0 %v390
      %400 = vmatpush.bf16.msra.mxu0 %v389
      %401 = vmatpush.bf16.msra.mxu0 %v388
      %402 = vmatpush.bf16.msra.mxu0 %v387
      %403 = vmatpush.bf16.msra.mxu0 %v386
      %404 = vmatpush.bf16.msra.mxu0 %v385
      %405 = vmatpush.bf16.msra.mxu0 %v384
      %406 = vmatpush.bf16.msra.mxu0 %v383
      %407 = vmatmul.bf16.gmra.mxu0 %v333
      %v408 = vpop.f32.mrf.mxu0
      %v409 = vadd.f32 0.0, %v408
      %v410 = vpop.f32.mrf.mxu0
      %411 = vdwg.mxu0
      %v412 = vadd.f32 %v329, %v409
      %v413 = vld [vmem:[#allocation2 + $0x3] sm:$0xff]
      %v414 = vpack.c.bf16 %v413, %v413
      %s415 = scalar_lea.vmem %s1, 192
      %v416 = vld [vmem:[%s415] sm:$0xf]
      %v417 = vld [vmem:[%s415 + $0x4] sm:$0xf]
      %v418 = vld [vmem:[%s415 + $0x8] sm:$0xf]
      %v419 = vld [vmem:[%s415 + $0xc] sm:$0xf]
      %v420 = vld [vmem:[%s415 + $0x10] sm:$0xf]
      %v421 = vld [vmem:[%s415 + $0x14] sm:$0xf]
      %v422 = vld [vmem:[%s415 + $0x18] sm:$0xf]
      %v423 = vld [vmem:[%s415 + $0x1c] sm:$0xf]
      %v424 = vld [vmem:[%s415 + $0x20] sm:$0xf]
      %v425 = vld [vmem:[%s415 + $0x24] sm:$0xf]
      %v426 = vld [vmem:[%s415 + $0x28] sm:$0xf]
      %v427 = vld [vmem:[%s415 + $0x2c] sm:$0xf]
      %v428 = vld [vmem:[%s415 + $0x30] sm:$0xf]
      %v429 = vld [vmem:[%s415 + $0x34] sm:$0xf]
      %v430 = vld [vmem:[%s415 + $0x38] sm:$0xf]
      %v431 = vld [vmem:[%s415 + $0x3c] sm:$0xf]
      %v448 = vunpack.c.l.b16 %v416
      %v449 = vunpack.c.l.b16 %v417
      %v450 = vunpack.c.l.b16 %v418
      %v451 = vunpack.c.l.b16 %v419
      %v452 = vunpack.c.l.b16 %v420
      %v453 = vunpack.c.l.b16 %v421
      %v454 = vunpack.c.l.b16 %v422
      %v455 = vunpack.c.l.b16 %v423
      %v456 = vunpack.c.l.b16 %v424
      %v457 = vunpack.c.l.b16 %v425
      %v458 = vunpack.c.l.b16 %v426
      %v459 = vunpack.c.l.b16 %v427
      %v460 = vunpack.c.l.b16 %v428
      %v461 = vunpack.c.l.b16 %v429
      %v462 = vunpack.c.l.b16 %v430
      %v463 = vunpack.c.l.b16 %v431
      %v464 = vpack.c.b16 %v449, %v448
      %v465 = vpack.c.b16 %v451, %v450
      %v466 = vpack.c.b16 %v453, %v452
      %v467 = vpack.c.b16 %v455, %v454
      %v468 = vpack.c.b16 %v457, %v456
      %v469 = vpack.c.b16 %v459, %v458
      %v470 = vpack.c.b16 %v461, %v460
      %v471 = vpack.c.b16 %v463, %v462
      %480 = vmatpush.bf16.msra.mxu0 %v471
      %481 = vmatpush.bf16.msra.mxu0 %v470
      %482 = vmatpush.bf16.msra.mxu0 %v469
      %483 = vmatpush.bf16.msra.mxu0 %v468
      %484 = vmatpush.bf16.msra.mxu0 %v467
      %485 = vmatpush.bf16.msra.mxu0 %v466
      %486 = vmatpush.bf16.msra.mxu0 %v465
      %487 = vmatpush.bf16.msra.mxu0 %v464
      %488 = vmatmul.bf16.gmra.mxu0 %v414
      %v489 = vpop.f32.mrf.mxu0
      %v490 = vadd.f32 0.0, %v489
      %v491 = vpop.f32.mrf.mxu0
      %492 = vdwg.mxu0
      %v493 = vadd.f32 %v412, %v490
      %v494 = vld [vmem:[#allocation2 + $0x4] sm:$0xff]
      %v495 = vpack.c.bf16 %v494, %v494
      %s496 = scalar_lea.vmem %s1, 256
      %v497 = vld [vmem:[%s496] sm:$0xf]
      %v498 = vld [vmem:[%s496 + $0x4] sm:$0xf]
      %v499 = vld [vmem:[%s496 + $0x8] sm:$0xf]
      %v500 = vld [vmem:[%s496 + $0xc] sm:$0xf]
      %v501 = vld [vmem:[%s496 + $0x10] sm:$0xf]
      %v502 = vld [vmem:[%s496 + $0x14] sm:$0xf]
      %v503 = vld [vmem:[%s496 + $0x18] sm:$0xf]
      %v504 = vld [vmem:[%s496 + $0x1c] sm:$0xf]
      %v505 = vld [vmem:[%s496 + $0x20] sm:$0xf]
      %v506 = vld [vmem:[%s496 + $0x24] sm:$0xf]
      %v507 = vld [vmem:[%s496 + $0x28] sm:$0xf]
      %v508 = vld [vmem:[%s496 + $0x2c] sm:$0xf]
      %v509 = vld [vmem:[%s496 + $0x30] sm:$0xf]
      %v510 = vld [vmem:[%s496 + $0x34] sm:$0xf]
      %v511 = vld [vmem:[%s496 + $0x38] sm:$0xf]
      %v512 = vld [vmem:[%s496 + $0x3c] sm:$0xf]
      %v529 = vunpack.c.l.b16 %v497
      %v530 = vunpack.c.l.b16 %v498
      %v531 = vunpack.c.l.b16 %v499
      %v532 = vunpack.c.l.b16 %v500
      %v533 = vunpack.c.l.b16 %v501
      %v534 = vunpack.c.l.b16 %v502
      %v535 = vunpack.c.l.b16 %v503
      %v536 = vunpack.c.l.b16 %v504
      %v537 = vunpack.c.l.b16 %v505
      %v538 = vunpack.c.l.b16 %v506
      %v539 = vunpack.c.l.b16 %v507
      %v540 = vunpack.c.l.b16 %v508
      %v541 = vunpack.c.l.b16 %v509
      %v542 = vunpack.c.l.b16 %v510
      %v543 = vunpack.c.l.b16 %v511
      %v544 = vunpack.c.l.b16 %v512
      %v545 = vpack.c.b16 %v530, %v529
      %v546 = vpack.c.b16 %v532, %v531
      %v547 = vpack.c.b16 %v534, %v533
      %v548 = vpack.c.b16 %v536, %v535
      %v549 = vpack.c.b16 %v538, %v537
      %v550 = vpack.c.b16 %v540, %v539
      %v551 = vpack.c.b16 %v542, %v541
      %v552 = vpack.c.b16 %v544, %v543
      %561 = vmatpush.bf16.msra.mxu0 %v552
      %562 = vmatpush.bf16.msra.mxu0 %v551
      %563 = vmatpush.bf16.msra.mxu0 %v550
      %564 = vmatpush.bf16.msra.mxu0 %v549
      %565 = vmatpush.bf16.msra.mxu0 %v548
      %566 = vmatpush.bf16.msra.mxu0 %v547
      %567 = vmatpush.bf16.msra.mxu0 %v546
      %568 = vmatpush.bf16.msra.mxu0 %v545
      %569 = vmatmul.bf16.gmra.mxu0 %v495
      %v570 = vpop.f32.mrf.mxu0
      %v571 = vadd.f32 0.0, %v570
      %v572 = vpop.f32.mrf.mxu0
      %573 = vdwg.mxu0
      %v574 = vadd.f32 %v493, %v571
      %v575 = vld [vmem:[%s2] sm:$0x1]
      %v577 = vperm.slane %v575, 0
      %v579 = vadd.f32 %v574, %v577
      %v580 = vrcp.pop %v579
      %v581 = vmul.f32 %v167, %v580
      %v582 = vmax.f32 %v581, 0.0
      %583 = vst [vmem:[%s165] sm:$0xff] %v582
      %p584 = scmp.lt.s32.totalorder %s14, 1
      %s585 = scalar_select %p584, %s14, 1
      %s586 = smul.addr %s585, 8
      %s587 = scalar_lea.vmem %s3, %s586
      // Predicated region
      $region33: #{divnorm_forward.1} parent=31 // pred_check
        %p588 = pneg %p100
      $region34: #{divnorm_forward.1} parent=31 // pred_check_branch
        %590 = sbr.rel (%p588) target = $region36
      $region35: #{divnorm_forward.1} parent=31 // pred_region
        _
      $region36: #{divnorm_forward.1} parent=31 // pred_fallthru
        _
    $region32: #{divnorm_forward.1} parent=5 // pred_fallthru
      _
    %p591 = scmp.le.s32.totalorder 2, %s9
    // Predicated region
    $region37: #{divnorm_forward.1} parent=5 // pred_check
      %p592 = pneg %p591
    $region38: #{divnorm_forward.1} parent=5 // pred_check_branch
      %594 = sbr.rel (%p592) target = $region40
    $region39: #{divnorm_forward.1} parent=5 // pred_region
      %s595 = ssub.s32 %s9, 2
      // Predicated region
      $region41: #{divnorm_forward.1} parent=39 // pred_check
        %p596 = pneg %p106
      $region42: #{divnorm_forward.1} parent=39 // pred_check_branch
        %598 = sbr.rel (%p596) target = $region44
      $region43: #{divnorm_forward.1} parent=39 // pred_region
        %p599 = scmp.lt.s32.totalorder %s15, 1
        %s600 = scalar_select %p599, %s15, 1
        %s601 = smul.addr %s600, 8
        %s602 = scalar_lea.vmem %s3, %s601
      $region44: #{divnorm_forward.1} parent=39 // pred_fallthru
        _
    $region40: #{divnorm_forward.1} parent=5 // pred_fallthru
      _
  $region6: #{divnorm_forward.1} parent=0 // loop_footer
    %s13 = sadd.s32 1, %s9
  $region7: #{divnorm_forward.1} parent=0 // loop_footer_branch
    %8 = sbr.rel target = $region3
  $region8: #{divnorm_forward.1} parent=0 // loop_exit
    _

</llo_original>
